<compile_context>
chip_gen: v7x
topology: tpu7x:2x2x1
jax: 0.10.0
libtpu: 0.0.40
codegen_flags: <defaults>
</compile_context>

<pallas_src>
import functools
import math

import jax
import jax.numpy as jnp
from jax.experimental import pallas as pl
from jax.experimental.pallas import tpu as pltpu


_LN_EPS = 1e-12                         # HF BERT LayerNorm eps
_GELU_C = 0.7978845608028654            # sqrt(2/pi) for tanh-approx GELU


def _detect_vmem_limit():
    """Per-generation VMEM limit with headroom (v7x: 64 MiB phys, v5e/v6e: 128)."""
    cap = None
    try:
        info_fn = getattr(pltpu, "get_tpu_info", None)
        if info_fn is not None:
            cap = getattr(info_fn(), "vmem_capacity_bytes", None)
    except Exception:
        cap = None
    if not cap:
        cap = 64 * 1024 * 1024          # conservative: assume v7x-sized VMEM
    return min(int(cap) * 7 // 8, 110 * 1024 * 1024)


_VMEM_LIMIT = _detect_vmem_limit()
_BIG_VMEM = _VMEM_LIMIT > 80 * 1024 * 1024   # v5e / v6e (128 MiB physical)

_TILE_CANDS = (2048, 1024, 768, 512, 256, 128)


def _pick_tile(dim, cap=1024):
    """Largest MXU-friendly tile <= cap that evenly divides dim; else full dim."""
    for c in _TILE_CANDS:
        if c <= cap and dim >= c and dim % c == 0:
            return c
    return dim


# ----------------------------------------------------------------------------
# Tiled matmul + bias (+ optional fused tanh-GELU epilogue)
# ----------------------------------------------------------------------------
def _matmul_bias_kernel(x_ref, w_ref, b_ref, o_ref, acc_ref, *, gelu):
    @pl.when(pl.program_id(2) == 0)
    def _init():
        acc_ref[...] = jnp.zeros_like(acc_ref)

    acc_ref[...] += jnp.dot(x_ref[...], w_ref[...],
                            preferred_element_type=jnp.float32)

    @pl.when(pl.program_id(2) == pl.num_programs(2) - 1)
    def _store():
        y = acc_ref[...] + b_ref[...]
        if gelu:
            # tanh-approx GELU: tanh goes to the EUP slot (co-issues with MXU).
            y = 0.5 * y * (1.0 + jnp.tanh(_GELU_C * (y + 0.044715 * y * y * y)))
        o_ref[...] = y.astype(o_ref.dtype)


def linear(x, w, b, *, gelu=False, out_dtype=jnp.bfloat16):
    M, K = x.shape
    _, N = w.shape
    tm = _pick_tile(M, cap=1024)
    tn = _pick_tile(N, cap=1024)   # prefers full 768 / 1024 lane-wide blocks
    tk = _pick_tile(K, cap=1024)
    kern = functools.partial(_matmul_bias_kernel, gelu=gelu)
    # TODO(synk): sweep pipeline_mode=pl.Buffered(3) on the weight spec once a
    #             profile shows the weight DMA is still exposed (revert on v7x
    #             if it becomes VMEM-bound).
    return pl.pallas_call(
        kern,
        out_shape=jax.ShapeDtypeStruct((M, N), out_dtype),
        grid=(M // tm, N // tn, K // tk),
        in_specs=[
            pl.BlockSpec((tm, tk), lambda i, j, k: (i, k)),
            pl.BlockSpec((tk, tn), lambda i, j, k: (k, j)),
            pl.BlockSpec((1, tn), lambda i, j, k: (0, j)),
        ],
        out_specs=pl.BlockSpec((tm, tn), lambda i, j, k: (i, j)),
        scratch_shapes=[pltpu.VMEM((tm, tn), jnp.float32)],
        compiler_params=pltpu.CompilerParams(
            dimension_semantics=("parallel", "parallel", "arbitrary"),
            vmem_limit_bytes=_VMEM_LIMIT),
    )(x, w, b.reshape(1, N))


# ----------------------------------------------------------------------------
# Tiled matmul + bias + residual add + LayerNorm fused epilogue (N untiled)
# ----------------------------------------------------------------------------
def _matmul_bias_add_ln_kernel(x_ref, w_ref, b_ref, r_ref, g_ref, beta_ref,
                               o_ref, acc_ref):
    @pl.when(pl.program_id(1) == 0)
    def _init():
        acc_ref[...] = jnp.zeros_like(acc_ref)

    acc_ref[...] += jnp.dot(x_ref[...], w_ref[...],
                            preferred_element_type=jnp.float32)

    @pl.when(pl.program_id(1) == pl.num_programs(1) - 1)
    def _store():
        h = acc_ref[...] + b_ref[...] + r_ref[...].astype(jnp.float32)
        mean = jnp.mean(h, axis=-1, keepdims=True)
        var = jnp.mean(jnp.square(h - mean), axis=-1, keepdims=True)
        inv = jax.lax.rsqrt(var + _LN_EPS)
        o_ref[...] = ((h - mean) * inv * g_ref[...]
                      + beta_ref[...]).astype(o_ref.dtype)


def linear_add_layernorm(x, w, b, residual, gamma, beta,
                         *, out_dtype=jnp.bfloat16):
    M, K = x.shape
    _, N = w.shape
    # Bigger row tiles cut weight re-fetches (M/tm streams of the (tk, N) block).
    tm = _pick_tile(M, cap=(2048 if _BIG_VMEM else 1024))
    tk = _pick_tile(K, cap=1024)
    return pl.pallas_call(
        _matmul_bias_add_ln_kernel,
        out_shape=jax.ShapeDtypeStruct((M, N), out_dtype),
        grid=(M // tm, K // tk),
        in_specs=[
            pl.BlockSpec((tm, tk), lambda i, k: (i, k)),
            pl.BlockSpec((tk, N), lambda i, k: (k, 0)),
            pl.BlockSpec((1, N), lambda i, k: (0, 0)),
            pl.BlockSpec((tm, N), lambda i, k: (i, 0)),
            pl.BlockSpec((1, N), lambda i, k: (0, 0)),
            pl.BlockSpec((1, N), lambda i, k: (0, 0)),
        ],
        out_specs=pl.BlockSpec((tm, N), lambda i, k: (i, 0)),
        scratch_shapes=[pltpu.VMEM((tm, N), jnp.float32)],
        compiler_params=pltpu.CompilerParams(
            dimension_semantics=("parallel", "arbitrary"),
            vmem_limit_bytes=_VMEM_LIMIT),
    )(x, w, b.reshape(1, N), residual, gamma.reshape(1, N), beta.reshape(1, N))


# ----------------------------------------------------------------------------
# LayerNorm (no residual) for the embedding output, tiled over rows
# ----------------------------------------------------------------------------
def _layernorm_kernel(x_ref, g_ref, b_ref, o_ref):
    h = x_ref[...].astype(jnp.float32)
    mean = jnp.mean(h, axis=-1, keepdims=True)
    var = jnp.mean(jnp.square(h - mean), axis=-1, keepdims=True)
    inv = jax.lax.rsqrt(var + _LN_EPS)
    o_ref[...] = ((h - mean) * inv * g_ref[...] + b_ref[...]).astype(o_ref.dtype)


def layernorm(x, gamma, beta, *, out_dtype=jnp.bfloat16):
    M, H = x.shape
    tm = _pick_tile(M, cap=(2048 if _BIG_VMEM else 1024))
    return pl.pallas_call(
        _layernorm_kernel,
        out_shape=jax.ShapeDtypeStruct((M, H), out_dtype),
        grid=(M // tm,),
        in_specs=[
            pl.BlockSpec((tm, H), lambda i: (i, 0)),
            pl.BlockSpec((1, H), lambda i: (0, 0)),
            pl.BlockSpec((1, H), lambda i: (0, 0)),
        ],
        out_specs=pl.BlockSpec((tm, H), lambda i: (i, 0)),
        compiler_params=pltpu.CompilerParams(
            dimension_semantics=("parallel",),
            vmem_limit_bytes=_VMEM_LIMIT),
    )(x, gamma.reshape(1, H), beta.reshape(1, H))


# ----------------------------------------------------------------------------
# Flash-style attention.
#   grid = (batch, head_group, kv_chunk); a head_group is a 128-lane-aligned
#   bundle of heads (pairs at head_dim=64), carved out of the fused (B,S,3H)
#   QKV activation purely via BlockSpec index_maps (no transposes in JAX, no
#   in-kernel dynamic lane slicing).  Online softmax + fp32 VMEM accumulators;
#   the output block is written with a single lane-dense store per head group.
#   Softmax scale is folded into the fused Q projection weights/bias.
# TODO(synk): tile the query axis too for extremely long sequences (S >> 4k).
# ----------------------------------------------------------------------------
def _attention_kernel(q_ref, k_ref, v_ref, bias_ref, o_ref,
                      m_sc, l_sc, acc_sc, *, heads_per_block, head_dim):
    kv = pl.program_id(2)

    @pl.when(kv == 0)
    def _init():
        m_sc[...] = jnp.full_like(m_sc, -1e30)
        l_sc[...] = jnp.zeros_like(l_sc)
        acc_sc[...] = jnp.zeros_like(acc_sc)

    bias = bias_ref[0]                          # (1, tkv) fp32 additive mask
    for j in range(heads_per_block):            # static, <= 2 at head_dim=64
        sl = slice(j * head_dim, (j + 1) * head_dim)
        q = q_ref[0, :, sl]                     # (S,   d) bf16 (pre-scaled)
        k = k_ref[0, :, sl]                     # (tkv, d) bf16
        v = v_ref[0, :, sl]                     # (tkv, d) bf16
        s = jax.lax.dot_general(q, k, (((1,), (1,)), ((), ())),
                                preferred_element_type=jnp.float32) + bias
        m_prev = m_sc[:, j:j + 1]
        m_new = jnp.maximum(m_prev, jnp.max(s, axis=-1, keepdims=True))
        alpha = jnp.exp(m_prev - m_new)
        p = jnp.exp(s - m_new)
        l_sc[:, j:j + 1] = alpha * l_sc[:, j:j + 1] + jnp.sum(
            p, axis=-1, keepdims=True)
        acc_sc[:, sl] = alpha * acc_sc[:, sl] + jnp.dot(
            p.astype(v.dtype), v, preferred_element_type=jnp.float32)
        m_sc[:, j:j + 1] = m_new

    @pl.when(kv == pl.num_programs(2) - 1)
    def _finalize():
        for j in range(heads_per_block):
            sl = slice(j * head_dim, (j + 1) * head_dim)
            # exact reciprocal (runs once per head group; cost negligible).
            acc_sc[:, sl] = acc_sc[:, sl] / l_sc[:, j:j + 1]
        o_ref[0] = acc_sc[...].astype(o_ref.dtype)   # single lane-dense store


def attention(qkv, bias, cfg):
    B, S, _ = qkv.shape
    H, nH = cfg["hidden"], cfg["heads"]
    d = H // nH
    if d % 128 == 0:
        hpb = 1
    else:
        assert 128 % d == 0, "head_dim must divide 128 or be a multiple of 128"
        hpb = 128 // d
    assert nH % hpb == 0, "num_heads must be a multiple of heads-per-block"
    W = hpb * d                      # 128-lane-aligned head-group width
    n_groups = nH // hpb
    qb = H // W                      # lane-block offset of the K / V sections
    tkv = S if S <= 512 else _pick_tile(S, cap=512)
    n_kv = S // tkv

    kern = functools.partial(_attention_kernel,
                             heads_per_block=hpb, head_dim=d)
    return pl.pallas_call(
        kern,
        out_shape=jax.ShapeDtypeStruct((B, S, H), jnp.bfloat16),
        grid=(B, n_groups, n_kv),
        in_specs=[
            pl.BlockSpec((1, S, W), lambda b, p, kv: (b, 0, p)),
            pl.BlockSpec((1, tkv, W), lambda b, p, kv: (b, kv, qb + p)),
            pl.BlockSpec((1, tkv, W), lambda b, p, kv: (b, kv, 2 * qb + p)),
            pl.BlockSpec((1, 1, tkv), lambda b, p, kv: (b, 0, kv)),
        ],
        out_specs=pl.BlockSpec((1, S, W), lambda b, p, kv: (b, 0, p)),
        scratch_shapes=[pltpu.VMEM((S, hpb), jnp.float32),
                        pltpu.VMEM((S, hpb), jnp.float32),
                        pltpu.VMEM((S, W), jnp.float32)],
        compiler_params=pltpu.CompilerParams(
            dimension_semantics=("parallel", "parallel", "arbitrary"),
            vmem_limit_bytes=_VMEM_LIMIT),
    )(qkv, qkv, qkv, bias)


# ----------------------------------------------------------------------------
# Synthetic BERT parameters (deterministic init; no pretrained checkpoint)
# ----------------------------------------------------------------------------
def init_params(key, cfg):
    H, I = cfg["hidden"], cfg["intermediate"]

    def dense(k, shape):
        return jax.random.normal(k, shape, jnp.float32) * 0.02

    keys = jax.random.split(key, 8 + cfg["layers"] * 8)
    ki = iter(keys)
    params = {
        "word_emb": dense(next(ki), (cfg["vocab"], H)),
        "pos_emb": dense(next(ki), (cfg["max_pos"], H)),
        "type_emb": dense(next(ki), (cfg["type_vocab"], H)),
        "emb_ln_g": jnp.ones((H,), jnp.float32),
        "emb_ln_b": jnp.zeros((H,), jnp.float32),
        "start_w": dense(next(ki), (H, 2)),
        "start_b": jnp.zeros((2,), jnp.float32),
        "end_w": dense(next(ki), (H, 2)),
        "end_b": jnp.zeros((2,), jnp.float32),
        "layers": [],
    }
    for _ in range(cfg["layers"]):
        params["layers"].append({
            "q_w": dense(next(ki), (H, H)), "q_b": jnp.zeros((H,), jnp.float32),
            "k_w": dense(next(ki), (H, H)), "k_b": jnp.zeros((H,), jnp.float32),
            "v_w": dense(next(ki), (H, H)), "v_b": jnp.zeros((H,), jnp.float32),
            "ao_w": dense(next(ki), (H, H)), "ao_b": jnp.zeros((H,), jnp.float32),
            "attn_ln_g": jnp.ones((H,), jnp.float32),
            "attn_ln_b": jnp.zeros((H,), jnp.float32),
            "i_w": dense(next(ki), (H, I)), "i_b": jnp.zeros((I,), jnp.float32),
            "o_w": dense(next(ki), (I, H)), "o_b": jnp.zeros((H,), jnp.float32),
            "out_ln_g": jnp.ones((H,), jnp.float32),
            "out_ln_b": jnp.zeros((H,), jnp.float32),
        })
    return params


def prepare_params(params, cfg):
    """Fuse QKV (with folded softmax scale), fuse/pad classifier heads to a
    lane-dense 128-wide slab, and cast matmul weights to bf16."""
    H, nH = cfg["hidden"], cfg["heads"]
    scale = 1.0 / math.sqrt(H // nH)
    bf16 = jnp.bfloat16
    # TODO(synk): on v7x, optionally quantize the QKV/FFN weights to fp8 (fp32
    #             accumulation) for ~2x MXU throughput and half the weight DMA.

    head_w = jnp.concatenate([params["start_w"], params["end_w"]], axis=1)  # (H,4)
    head_b = jnp.concatenate([params["start_b"], params["end_b"]])          # (4,)
    pad = 128 - head_w.shape[1]
    head_w = jnp.pad(head_w, ((0, 0), (0, pad)))
    head_b = jnp.pad(head_b, ((0, pad),))

    prep = {
        "word_emb": params["word_emb"],
        "pos_emb": params["pos_emb"],
        "type_emb": params["type_emb"],
        "emb_ln_g": params["emb_ln_g"],
        "emb_ln_b": params["emb_ln_b"],
        "head_w": head_w.astype(bf16),
        "head_b": head_b,
        "layers": [],
    }
    for lyr in params["layers"]:
        qkv_w = jnp.concatenate(
            [lyr["q_w"] * scale, lyr["k_w"], lyr["v_w"]], axis=1)   # (H, 3H)
        qkv_b = jnp.concatenate([lyr["q_b"] * scale, lyr["k_b"], lyr["v_b"]])
        prep["layers"].append({
            "qkv_w": qkv_w.astype(bf16), "qkv_b": qkv_b,
            "ao_w": lyr["ao_w"].astype(bf16), "ao_b": lyr["ao_b"],
            "attn_ln_g": lyr["attn_ln_g"], "attn_ln_b": lyr["attn_ln_b"],
            "i_w": lyr["i_w"].astype(bf16), "i_b": lyr["i_b"],
            "o_w": lyr["o_w"].astype(bf16), "o_b": lyr["o_b"],
            "out_ln_g": lyr["out_ln_g"], "out_ln_b": lyr["out_ln_b"],
        })
    return prep


# ----------------------------------------------------------------------------
# Forward pass (== BERTChunkClassifier.forward, eval mode)
# ----------------------------------------------------------------------------
def bert_chunk_classifier(prep, input_ids, attention_mask, cfg):
    B, S = input_ids.shape
    H = cfg["hidden"]

    # --- embeddings (gather is plain-JAX glue; LayerNorm is a Pallas kernel) ---
    pos_ids = jnp.arange(S)
    tok_type = jnp.zeros((B, S), jnp.int32)
    emb = (prep["word_emb"][input_ids]
           + prep["pos_emb"][pos_ids][None, :, :]
           + prep["type_emb"][tok_type])                       # (B, S, H) fp32
    emb = emb.astype(jnp.bfloat16)                             # halve LN HBM read
    x = layernorm(emb.reshape(B * S, H),
                  prep["emb_ln_g"], prep["emb_ln_b"])          # (B*S, H) bf16

    # precomputed additive attention-mask bias (HF BERT convention)
    bias = ((1.0 - attention_mask.astype(jnp.float32)) * -10000.0
            ).reshape(B, 1, S)

    # --- transformer encoder layers ---
    for layer in prep["layers"]:
        qkv = linear(x, layer["qkv_w"], layer["qkv_b"])        # fused QKV (B*S, 3H)
        ctx = attention(qkv.reshape(B, S, 3 * H), bias, cfg)   # (B, S, H)
        x = linear_add_layernorm(ctx.reshape(B * S, H),
                                 layer["ao_w"], layer["ao_b"],
                                 x, layer["attn_ln_g"], layer["attn_ln_b"])
        inter = linear(x, layer["i_w"], layer["i_b"], gelu=True)   # fused bias+GELU
        x = linear_add_layernorm(inter, layer["o_w"], layer["o_b"],
                                 x, layer["out_ln_g"], layer["out_ln_b"])

    # --- start / end classifiers: one lane-dense matmul, sliced outside ---
    logits = linear(x, prep["head_w"], prep["head_b"],
                    out_dtype=jnp.float32)                     # (B*S, 128)
    start_logits = logits[:, 0:2].reshape(B, S, 2)
    end_logits = logits[:, 2:4].reshape(B, S, 2)
    return start_logits, end_logits


# ----------------------------------------------------------------------------
if __name__ == "__main__":
    # Small shapes, but with head_dim=64 (like real BERT) so the 128-lane
    # head-group blocking in the attention kernel is exercised.
    cfg = dict(vocab=100, hidden=256, layers=2, heads=4,
               intermediate=1024, max_pos=16, type_vocab=2)
    B, S = 2, 8

    key = jax.random.PRNGKey(0)
    k_params, k_ids = jax.random.split(key)
    params = init_params(k_params, cfg)
    prep = prepare_params(params, cfg)

    input_ids = jax.random.randint(k_ids, (B, S), 0, cfg["vocab"], jnp.int32)
    attention_mask = jnp.array(
        [[1, 1, 1, 1, 1, 1, 1, 1],
         [1, 1, 1, 1, 1, 1, 0, 0]], dtype=jnp.int32)

    start_logits, end_logits = bert_chunk_classifier(
        prep, input_ids, attention_mask, cfg)
    jax.block_until_ready((start_logits, end_logits))

    assert start_logits.shape == (B, S, 2) and end_logits.shape == (B, S, 2)
    assert bool(jnp.all(jnp.isfinite(start_logits)))
    assert bool(jnp.all(jnp.isfinite(end_logits)))
    print("KERNEL_OK")
</pallas_src>

<mosaic_0001>
module attributes {stable_mosaic.version = 11 : i64} {
  func.func @_layernorm_kernel(%arg0: i32, %arg1: memref<16x256xbf16, #tpu.memory_space<vmem>>, %arg2: memref<1x256xf32, #tpu.memory_space<vmem>>, %arg3: memref<1x256xf32, #tpu.memory_space<vmem>>, %arg4: memref<16x256xbf16, #tpu.memory_space<vmem>>) attributes {dimension_semantics = [#tpu.dimension_semantics<parallel>], iteration_bounds = array<i64: 1>, scalar_prefetch = 0 : i64, scratch_operands = 0 : i64, tpu.core_type = #tpu.core_type<tc>, window_params = [{transform_indices = @transform_0, window_bounds = array<i64: 16, 256>}, {pipeline_mode = #tpu.pipeline_mode<synchronous>, transform_indices = @transform_1, window_bounds = array<i64: 1, 256>}, {pipeline_mode = #tpu.pipeline_mode<synchronous>, transform_indices = @transform_2, window_bounds = array<i64: 1, 256>}, {transform_indices = @transform_3, window_bounds = array<i64: 16, 256>}]} {
    %c0 = arith.constant 0 : index
    %c0_0 = arith.constant 0 : index
    %0 = vector.load %arg1[%c0, %c0_0] : memref<16x256xbf16, #tpu.memory_space<vmem>>, vector<16x256xbf16>
    %1 = arith.extf %0 : vector<16x256xbf16> to vector<16x256xf32>
    %cst = arith.constant dense<0.000000e+00> : vector<16xf32>
    %2 = vector.multi_reduction <add>, %1, %cst [1] : vector<16x256xf32> to vector<16xf32>
    %3 = vector.shape_cast %2 : vector<16xf32> to vector<16x1xf32>
    %cst_1 = arith.constant 2.560000e+02 : f32
    %4 = vector.broadcast %cst_1 : f32 to vector<16x1xf32>
    %5 = arith.divf %3, %4 : vector<16x1xf32>
    %6 = vector.broadcast %5 : vector<16x1xf32> to vector<16x256xf32>
    %7 = arith.subf %1, %6 : vector<16x256xf32>
    %8 = arith.mulf %7, %7 : vector<16x256xf32>
    %cst_2 = arith.constant dense<0.000000e+00> : vector<16xf32>
    %9 = vector.multi_reduction <add>, %8, %cst_2 [1] : vector<16x256xf32> to vector<16xf32>
    %10 = vector.shape_cast %9 : vector<16xf32> to vector<16x1xf32>
    %cst_3 = arith.constant 2.560000e+02 : f32
    %11 = vector.broadcast %cst_3 : f32 to vector<16x1xf32>
    %12 = arith.divf %10, %11 : vector<16x1xf32>
    %cst_4 = arith.constant 9.99999996E-13 : f32
    %13 = vector.broadcast %cst_4 : f32 to vector<16x1xf32>
    %14 = arith.addf %12, %13 : vector<16x1xf32>
    %15 = math.rsqrt %14 : vector<16x1xf32>
    %16 = vector.broadcast %5 : vector<16x1xf32> to vector<16x256xf32>
    %17 = arith.subf %1, %16 : vector<16x256xf32>
    %18 = vector.broadcast %15 : vector<16x1xf32> to vector<16x256xf32>
    %19 = arith.mulf %17, %18 : vector<16x256xf32>
    %c0_5 = arith.constant 0 : index
    %c0_6 = arith.constant 0 : index
    %20 = vector.load %arg2[%c0_5, %c0_6] : memref<1x256xf32, #tpu.memory_space<vmem>>, vector<1x256xf32>
    %21 = vector.broadcast %20 : vector<1x256xf32> to vector<16x256xf32>
    %22 = arith.mulf %19, %21 : vector<16x256xf32>
    %c0_7 = arith.constant 0 : index
    %c0_8 = arith.constant 0 : index
    %23 = vector.load %arg3[%c0_7, %c0_8] : memref<1x256xf32, #tpu.memory_space<vmem>>, vector<1x256xf32>
    %24 = vector.broadcast %23 : vector<1x256xf32> to vector<16x256xf32>
    %25 = arith.addf %22, %24 : vector<16x256xf32>
    %26 = arith.truncf %25 : vector<16x256xf32> to vector<16x256xbf16>
    %c0_9 = arith.constant 0 : index
    %c0_10 = arith.constant 0 : index
    %27 = vector.load %arg4[%c0_9, %c0_10] : memref<16x256xbf16, #tpu.memory_space<vmem>>, vector<16x256xbf16>
    tpu.vector_store %arg4[%c0_9, %c0_10], %26 {strides = array<i32>} : memref<16x256xbf16, #tpu.memory_space<vmem>>, vector<16x256xbf16>,
    return
  }
  func.func @transform_0(%arg0: i32) -> (i32, i32) {
    %c0_i32 = arith.constant 0 : i32
    %c0_i32_0 = arith.constant 0 : i32
    return %arg0, %c0_i32 : i32, i32
  }
  func.func @transform_1(%arg0: i32) -> (i32, i32) {
    %c0_i32 = arith.constant 0 : i32
    %c0_i32_0 = arith.constant 0 : i32
    %c0_i32_1 = arith.constant 0 : i32
    return %c0_i32, %c0_i32_0 : i32, i32
  }
  func.func @transform_2(%arg0: i32) -> (i32, i32) {
    %c0_i32 = arith.constant 0 : i32
    %c0_i32_0 = arith.constant 0 : i32
    %c0_i32_1 = arith.constant 0 : i32
    return %c0_i32, %c0_i32_0 : i32, i32
  }
  func.func @transform_3(%arg0: i32) -> (i32, i32) {
    %c0_i32 = arith.constant 0 : i32
    %c0_i32_0 = arith.constant 0 : i32
    return %arg0, %c0_i32 : i32, i32
  }
}

</mosaic_0001>

<llo_original>
// kernel: tpu_custom_call.1
$region0: #{tpu_custom_call.1}
  #allocation0 [shape = 'u32[]', space=smem, size = 0x4, offset = 0x4, fixed_abs, tag = 'smem constant byte address 0x4 - core index']
  #allocation1 [shape = 'u32[144,128]{1,0:T(1,128)}', space=vmem, size = 0x12000, scoped, tag = 'internal scratch']
  %s0 = inlined_call_operand.hbm [shape: bf16[16,256], index: 0, kind: input, shape index: {}]
  %s1 = inlined_call_operand.vmem [shape: f32[1,256], index: 1, kind: input, shape index: {}]
  %s2 = inlined_call_operand.vmem [shape: f32[1,256], index: 2, kind: input, shape index: {}]
  %s3 = inlined_call_operand.hbm [shape: bf16[16,256], index: 3, kind: output, shape index: {}]
  %s4 = sld [smem:[#allocation0]]
  $region26: #{tpu_custom_call.1} parent=0
    _
  %s6 = ssub.s32 1, %s4
  %s7 = scalar_select 0, %s6, %s4
  $region1: #{tpu_custom_call.1} parent=0
    #allocation2 [shape = 'u8[8192]{0}', space=vmem, size = 0x2000, scoped, tag = 'input window, operand 0, single buffered']
    #allocation3 [shape = 's32[1]{0}', space=sflag, size = 0x4, scoped, tag = 'scoped memory for tpu_custom_call.1']
    #allocation4 [shape = 's32[1]{0}', space=sflag, size = 0x4, scoped, tag = 'scoped memory for tpu_custom_call.1']
    #allocation5 [shape = 'u8[8192]{0}', space=vmem, size = 0x2000, scoped, tag = 'output window, operand 0, single buffered']
    %8 = vsyncpa [#allocation3], 0
    %9 = vsyncpa [#allocation4], 0
    // Predicated region
    $region2: #{tpu_custom_call.1} parent=1 // pred_check
      _
    $region3: #{tpu_custom_call.1} parent=1 // pred_check_branch
      %11 = sbr.rel (0) target = $region5
    $region4: #{tpu_custom_call.1} parent=1 // pred_region
      %s13 = ssub.s32 256, 256
      %14 = vsyncadd [#allocation3], %s13
      %s15 = sshll.u32 [#allocation2], 4
      %s16 = int_to_ptr.vmem [resolvable:$true] %s15
      %21 = dma.hbm_to_vmem [thread:$0]  %s0, 256, %s16, [#allocation3], 128, 128, 8
    $region5: #{tpu_custom_call.1} parent=1 // pred_fallthru
      _
    // Predicated region
    $region6: #{tpu_custom_call.1} parent=1 // pred_check
      _
    $region7: #{tpu_custom_call.1} parent=1 // pred_check_branch
      %23 = sbr.rel (0) target = $region9
    $region8: #{tpu_custom_call.1} parent=1 // pred_region
      _
    $region9: #{tpu_custom_call.1} parent=1 // pred_fallthru
      _
    // Predicated region
    $region10: #{tpu_custom_call.1} parent=1 // pred_check
      _
    $region11: #{tpu_custom_call.1} parent=1 // pred_check_branch
      %25 = sbr.rel (0) target = $region13
    $region12: #{tpu_custom_call.1} parent=1 // pred_region
      _
    $region13: #{tpu_custom_call.1} parent=1 // pred_fallthru
      _
    // Predicated region
    $region14: #{tpu_custom_call.1} parent=1 // pred_check
      _
    $region15: #{tpu_custom_call.1} parent=1 // pred_check_branch
      %27 = sbr.rel (0) target = $region17
    $region16: #{tpu_custom_call.1} parent=1 // pred_region
      %28 = dma.done [#allocation3], 256
    $region17: #{tpu_custom_call.1} parent=1 // pred_fallthru
      _
    %v29 = vld [vmem:[#allocation2] sm:$0xff]
    %v30 = vld [vmem:[#allocation2 + $0x8] sm:$0xff]
    %v31 = vunpack.c.l.bf16 %v29
    %v32 = vunpack.c.h.bf16 %v29
    %v33 = vunpack.c.l.bf16 %v30
    %v34 = vunpack.c.h.bf16 %v30
    %v35 = vadd.f32 %v31, %v32
    %36 = vadd.xlane.f32.xlu0 %v35
    %v37 = vpop.xlane.xlu0 %36
    %v38 = vadd.f32 %v33, %v34
    %39 = vadd.xlane.f32.xlu0 %v38
    %v40 = vpop.xlane.xlu0 %39
    %v41 = vrcp.pop 256.0
    %v42 = vmul.f32 %v37, %v41
    %v43 = vmul.f32 %v40, %v41
    %v44 = vsub.f32 %v31, %v42
    %v45 = vsub.f32 %v32, %v42
    %v46 = vsub.f32 %v33, %v43
    %v47 = vsub.f32 %v34, %v43
    %v48 = vmul.f32 %v44, %v44
    %v49 = vmul.f32 %v45, %v45
    %v50 = vmul.f32 %v46, %v46
    %v51 = vmul.f32 %v47, %v47
    %v52 = vadd.f32 %v48, %v49
    %53 = vadd.xlane.f32.xlu0 %v52
    %v54 = vpop.xlane.xlu0 %53
    %v55 = vadd.f32 %v50, %v51
    %56 = vadd.xlane.f32.xlu0 %v55
    %v57 = vpop.xlane.xlu0 %56
    %v58 = vmul.f32 %v54, %v41
    %v59 = vmul.f32 %v57, %v41
    %v60 = vadd.f32 %v58, 1e-12
    %v61 = vadd.f32 %v59, 1e-12
    %v62 = vrsqrt.pop %v60
    %v63 = vrsqrt.pop %v61
    %v64 = vmul.f32 %v44, %v62
    %v65 = vmul.f32 %v45, %v62
    %v66 = vmul.f32 %v46, %v63
    %v67 = vmul.f32 %v47, %v63
    %v68 = vld [vmem:[%s1] sm:$0x3]
    %v70 = vlaneseq
    %v71 = vshrl.u32 %v70, 7
    %v72 = vsub.s32 0, %v71
    %v73 = vrot.slane %v68, %v72
    %v74 = vlaneseq
    %v75 = vshrl.u32 %v74, 7
    %v76 = vsub.s32 1, %v75
    %v77 = vrot.slane %v68, %v76
    %v80 = vmul.f32 %v64, %v73
    %v81 = vmul.f32 %v65, %v77
    %v82 = vmul.f32 %v66, %v73
    %v83 = vmul.f32 %v67, %v77
    %v84 = vld [vmem:[%s2] sm:$0x3]
    %v86 = vlaneseq
    %v87 = vshrl.u32 %v86, 7
    %v88 = vsub.s32 0, %v87
    %v89 = vrot.slane %v84, %v88
    %v90 = vlaneseq
    %v91 = vshrl.u32 %v90, 7
    %v92 = vsub.s32 1, %v91
    %v93 = vrot.slane %v84, %v92
    %v96 = vadd.f32 %v80, %v89
    %v97 = vadd.f32 %v81, %v93
    %v98 = vadd.f32 %v82, %v89
    %v99 = vadd.f32 %v83, %v93
    %v100 = vpack.c.bf16 %v98, %v96
    %v101 = vpack.c.bf16 %v99, %v97
    %v104 = vunpack.c.l.b16 %v100
    %v105 = vunpack.c.l.b16 %v101
    %v106 = vunpack.c.h.b16 %v100
    %v107 = vunpack.c.h.b16 %v101
    %v108 = vpack.c.b16 %v105, %v104
    %v109 = vpack.c.b16 %v107, %v106
    %112 = vst [vmem:[#allocation5] sm:$0xff] %v108
    %113 = vst [vmem:[#allocation5 + $0x8] sm:$0xff] %v109
    // Predicated region
    $region18: #{tpu_custom_call.1} parent=1 // pred_check
      _
    $region19: #{tpu_custom_call.1} parent=1 // pred_check_branch
      %115 = sbr.rel (0) target = $region21
    $region20: #{tpu_custom_call.1} parent=1 // pred_region
      %s117 = ssub.s32 256, 256
      %118 = vsyncadd [#allocation4], %s117
      %s119 = sshll.u32 [#allocation5], 4
      %s120 = int_to_ptr.vmem [resolvable:$true] %s119
      %125 = dma.vmem_to_hbm [thread:$0]  %s120, 256, %s3, [#allocation4], 128, 128, 8
    $region21: #{tpu_custom_call.1} parent=1 // pred_fallthru
      _
    // Predicated region
    $region22: #{tpu_custom_call.1} parent=1 // pred_check
      _
    $region23: #{tpu_custom_call.1} parent=1 // pred_check_branch
      %127 = sbr.rel (0) target = $region25
    $region24: #{tpu_custom_call.1} parent=1 // pred_region
      %128 = dma.done [#allocation4], 256
    $region25: #{tpu_custom_call.1} parent=1 // pred_fallthru
      _
    %129 = vsyncpa [#allocation3], 1
    %130 = vsyncpa [#allocation4], 1

</llo_original>
